<compile_context>
chip_gen: v7x
topology: tpu7x:2x2x1
jax: 0.10.0
libtpu: 0.0.40
codegen_flags: <defaults>
</compile_context>

<pallas_src>
import functools

import jax
import jax.numpy as jnp
from jax.experimental import pallas as pl
from jax.experimental.pallas import tpu as pltpu


def _cond_entropy_kernel(x_ref, o_ref, m_ref, s_ref, ez_ref, *,
                         num_classes, block_cols, col_ragged):
    """Online per-row entropy over class blocks.

    Carries, per row of the current row block:
      m  = running max of logits
      s  = running sum(exp(x - m))
      ez = running sum(exp(x - m) * (x - m))
    Final per-row entropy term = ez / s - log(s).
    """
    j = pl.program_id(1)

    @pl.when(j == 0)
    def _init():
        # -1e30 (finite) keeps alpha = exp(m_old - m_new) and
        # s_old * (m_old - m_new) free of inf/NaN on the first block.
        m_ref[...] = jnp.full_like(m_ref, -1e30)
        s_ref[...] = jnp.zeros_like(s_ref)
        ez_ref[...] = jnp.zeros_like(ez_ref)

    # (TB, TC) tile; cast per-tile so HBM traffic stays in the input dtype.
    x = x_ref[...].astype(jnp.float32)

    if col_ragged:
        # Last class block extends past C: mask the garbage lanes to a large
        # negative so exp() underflows to 0 (trace-time guarded; only emitted
        # when C is not a multiple of block_cols).
        col = j * block_cols + jax.lax.broadcasted_iota(jnp.int32, x.shape, 1)
        x = jnp.where(col < num_classes, x, -1e30)

    m_old = m_ref[...]                                         # (TB, 1)
    m_new = jnp.maximum(m_old, jnp.max(x, axis=1, keepdims=True))
    z = x - m_new
    e = jnp.exp(z)                                             # EUP
    alpha = jnp.exp(m_old - m_new)                             # (TB, 1)
    s_old = s_ref[...]

    s_ref[...] = alpha * s_old + jnp.sum(e, axis=1, keepdims=True)
    ez_ref[...] = (alpha * (ez_ref[...] + s_old * (m_old - m_new))
                   + jnp.sum(e * z, axis=1, keepdims=True))
    m_ref[...] = m_new

    @pl.when(j == pl.num_programs(1) - 1)
    def _finalize():
        s = s_ref[...]
        o_ref[...] = ez_ref[...] / s - jnp.log(s)


def conditional_entropy_loss(x, *, block_rows=None, block_cols=None,
                             target_tile_bytes=4 * 1024 * 1024):
    """x: (B, C) logits. Returns scalar f32 loss: -mean_row(sum_c p*log p)."""
    B, C = x.shape
    itemsize = jnp.dtype(x.dtype).itemsize
    LANE = 128
    # Packed-sublane multiple for the input dtype: 8 f32, 16 bf16, 32 int8.
    pack = 8 * max(1, 4 // itemsize)
    # Budget expressed in f32 elements per tile (temporaries are f32).
    budget_elems = max(target_tile_bytes // 4, pack * LANE)

    # ---- class-axis block ----
    if block_cols is None:
        c_lanes = pl.cdiv(C, LANE) * LANE
        if c_lanes * pack <= budget_elems:
            block_cols = C                        # whole row fits: no C tiling
        else:
            block_cols = max(LANE, (budget_elems // pack // LANE) * LANE)
    block_cols = min(block_cols, C)
    if block_cols != C and block_cols % LANE != 0:
        raise ValueError("block_cols must be a multiple of 128 or equal C")

    # ---- batch-axis block ----
    if block_rows is None:
        cl = pl.cdiv(block_cols, LANE) * LANE     # lanes occupied per row
        rows = max(pack, (budget_elems // cl) // pack * pack)
        block_rows = B if rows >= B else rows
    block_rows = min(block_rows, B)
    if block_rows != B and block_rows % 8 != 0:
        raise ValueError("block_rows must be a multiple of 8 or equal B")

    nb = pl.cdiv(B, block_rows)
    nc = pl.cdiv(C, block_cols)
    col_ragged = (nc > 1) and (C % block_cols != 0)

    kernel = functools.partial(
        _cond_entropy_kernel,
        num_classes=C, block_cols=block_cols, col_ragged=col_ragged)

    per_row = pl.pallas_call(
        kernel,
        out_shape=jax.ShapeDtypeStruct((B, 1), jnp.float32),
        grid_spec=pltpu.PrefetchScalarGridSpec(
            num_scalar_prefetch=0,
            grid=(nb, nc),
            in_specs=[pl.BlockSpec((block_rows, block_cols),
                                   lambda i, j: (i, j))],
            out_specs=pl.BlockSpec((block_rows, 1), lambda i, j: (i, 0)),
            scratch_shapes=[pltpu.VMEM((block_rows, 1), jnp.float32),   # m
                            pltpu.VMEM((block_rows, 1), jnp.float32),   # s
                            pltpu.VMEM((block_rows, 1), jnp.float32)],  # ez
        ),
        compiler_params=pltpu.CompilerParams(
            # Row blocks are independent -> shard across TCs on v7x;
            # class axis carries the online-softmax state -> arbitrary.
            dimension_semantics=("parallel", "arbitrary"),
            # Explicit scoped-VMEM budget: default is only 16 MiB on v5e and
            # the working set (2x input tile + f32 temporaries) is ~16-28 MiB
            # at the default 4 MiB tile budget; 40 MiB still leaves headroom
            # under v7x's 64 MiB physical VMEM.
            vmem_limit_bytes=40 * 1024 * 1024),
    )(x)

    # Final reduction over B f32 values: negligible vs. the B*C logits read.
    return -jnp.sum(per_row) / B


def _reference(x):
    # Pure-JAX reference matching the PyTorch module (2-D case).
    lsm = jax.nn.log_softmax(x, axis=1)
    sm = jax.nn.softmax(x, axis=1)
    b = jnp.sum(sm * lsm, axis=1)
    return -1.0 * jnp.mean(b, axis=0)


if __name__ == "__main__":
    key = jax.random.PRNGKey(0)
    k1, k2, k3, k4, k5 = jax.random.split(key, 5)

    def _check(out, ref, tag):
        jax.block_until_ready(out)
        assert jnp.allclose(out, ref, atol=2e-5, rtol=2e-5), (tag, out, ref)

    # 1) Small canonical shape: single block, full-dim C (32, lane-masked).
    x1 = jax.random.normal(k1, (8, 32), dtype=jnp.float32)
    _check(conditional_entropy_loss(x1), _reference(x1), "case1")

    # 2) Non-lane-aligned C (96) with (a) default plan and (b) forced small
    #    row blocks -> ragged last row block (dropped OOB writes).
    x2 = jax.random.normal(k2, (20, 96), dtype=jnp.float32)
    _check(conditional_entropy_loss(x2), _reference(x2), "case2a")
    _check(conditional_entropy_loss(x2, block_rows=8), _reference(x2), "case2b")

    # 3) Class-axis tiling (online max/sum carry across 3 class blocks).
    x3 = jax.random.normal(k3, (16, 384), dtype=jnp.float32)
    _check(conditional_entropy_loss(x3, block_cols=128), _reference(x3),
           "case3")

    # 4) Ragged class blocks (320 % 128 != 0 -> in-kernel column mask) plus
    #    ragged row blocks in the same call.
    x4 = jax.random.normal(k4, (24, 320), dtype=jnp.float32)
    _check(conditional_entropy_loss(x4, block_rows=16, block_cols=128),
           _reference(x4), "case4")

    # 5) bf16 input: DMA in bf16, cast to f32 in-kernel (pack=16 sizing path).
    x5 = jax.random.normal(k5, (32, 256), dtype=jnp.float32).astype(jnp.bfloat16)
    _check(conditional_entropy_loss(x5),
           _reference(x5.astype(jnp.float32)), "case5")

    print("KERNEL_OK")
</pallas_src>

<mosaic_0001>
module attributes {stable_mosaic.version = 11 : i64} {
  func.func @_cond_entropy_kernel(%arg0: i32, %arg1: i32, %arg2: memref<8x32xf32, #tpu.memory_space<vmem>>, %arg3: memref<8x1xf32, #tpu.memory_space<vmem>>, %arg4: memref<8x1xf32, #tpu.memory_space<vmem>>, %arg5: memref<8x1xf32, #tpu.memory_space<vmem>>, %arg6: memref<8x1xf32, #tpu.memory_space<vmem>>) attributes {dimension_semantics = [#tpu.dimension_semantics<parallel>, #tpu.dimension_semantics<arbitrary>], iteration_bounds = array<i64: 1, 1>, scalar_prefetch = 0 : i64, scratch_operands = 3 : i64, tpu.core_type = #tpu.core_type<tc>, window_params = [{transform_indices = @transform_0, window_bounds = array<i64: 8, 32>}, {transform_indices = @transform_1, window_bounds = array<i64: 8, 1>}]} {
    %c0_i32 = arith.constant 0 : i32
    %0 = arith.cmpi eq, %arg1, %c0_i32 : i32
    %1 = arith.extui %0 : i1 to i32
    %c0_i32_0 = arith.constant 0 : i32
    %2 = arith.cmpi ne, %1, %c0_i32_0 : i32
    scf.if %2 {
      %cst_18 = arith.constant -1.000000e+30 : f32
      %33 = vector.broadcast %cst_18 : f32 to vector<8x1xf32>
      %c0_19 = arith.constant 0 : index
      %c0_20 = arith.constant 0 : index
      %34 = vector.load %arg4[%c0_19, %c0_20] : memref<8x1xf32, #tpu.memory_space<vmem>>, vector<8x1xf32>
      tpu.vector_store %arg4[%c0_19, %c0_20], %33 {strides = array<i32>} : memref<8x1xf32, #tpu.memory_space<vmem>>, vector<8x1xf32>,
      %cst_21 = arith.constant 0.000000e+00 : f32
      %35 = vector.broadcast %cst_21 : f32 to vector<8x1xf32>
      %c0_22 = arith.constant 0 : index
      %c0_23 = arith.constant 0 : index
      %36 = vector.load %arg5[%c0_22, %c0_23] : memref<8x1xf32, #tpu.memory_space<vmem>>, vector<8x1xf32>
      tpu.vector_store %arg5[%c0_22, %c0_23], %35 {strides = array<i32>} : memref<8x1xf32, #tpu.memory_space<vmem>>, vector<8x1xf32>,
      %cst_24 = arith.constant 0.000000e+00 : f32
      %37 = vector.broadcast %cst_24 : f32 to vector<8x1xf32>
      %c0_25 = arith.constant 0 : index
      %c0_26 = arith.constant 0 : index
      %38 = vector.load %arg6[%c0_25, %c0_26] : memref<8x1xf32, #tpu.memory_space<vmem>>, vector<8x1xf32>
      tpu.vector_store %arg6[%c0_25, %c0_26], %37 {strides = array<i32>} : memref<8x1xf32, #tpu.memory_space<vmem>>, vector<8x1xf32>,
    } else {
    }
    %c0 = arith.constant 0 : index
    %c0_1 = arith.constant 0 : index
    %3 = vector.load %arg2[%c0, %c0_1] : memref<8x32xf32, #tpu.memory_space<vmem>>, vector<8x32xf32>
    %c0_2 = arith.constant 0 : index
    %c0_3 = arith.constant 0 : index
    %4 = vector.load %arg4[%c0_2, %c0_3] : memref<8x1xf32, #tpu.memory_space<vmem>>, vector<8x1xf32>
    %cst = arith.constant dense<0xFF800000> : vector<8xf32>
    %5 = vector.multi_reduction <maximumf>, %3, %cst [1] : vector<8x32xf32> to vector<8xf32>
    %6 = vector.shape_cast %5 : vector<8xf32> to vector<8x1xf32>
    %7 = arith.maximumf %4, %6 : vector<8x1xf32>
    %8 = vector.broadcast %7 : vector<8x1xf32> to vector<8x32xf32>
    %9 = arith.subf %3, %8 : vector<8x32xf32>
    %10 = math.exp %9 : vector<8x32xf32>
    %11 = arith.subf %4, %7 : vector<8x1xf32>
    %12 = math.exp %11 : vector<8x1xf32>
    %c0_4 = arith.constant 0 : index
    %c0_5 = arith.constant 0 : index
    %13 = vector.load %arg5[%c0_4, %c0_5] : memref<8x1xf32, #tpu.memory_space<vmem>>, vector<8x1xf32>
    %14 = arith.mulf %12, %13 : vector<8x1xf32>
    %cst_6 = arith.constant dense<0.000000e+00> : vector<8xf32>
    %15 = vector.multi_reduction <add>, %10, %cst_6 [1] : vector<8x32xf32> to vector<8xf32>
    %16 = vector.shape_cast %15 : vector<8xf32> to vector<8x1xf32>
    %17 = arith.addf %14, %16 : vector<8x1xf32>
    %c0_7 = arith.constant 0 : index
    %c0_8 = arith.constant 0 : index
    %18 = vector.load %arg5[%c0_7, %c0_8] : memref<8x1xf32, #tpu.memory_space<vmem>>, vector<8x1xf32>
    tpu.vector_store %arg5[%c0_7, %c0_8], %17 {strides = array<i32>} : memref<8x1xf32, #tpu.memory_space<vmem>>, vector<8x1xf32>,
    %c0_9 = arith.constant 0 : index
    %c0_10 = arith.constant 0 : index
    %19 = vector.load %arg6[%c0_9, %c0_10] : memref<8x1xf32, #tpu.memory_space<vmem>>, vector<8x1xf32>
    %20 = arith.subf %4, %7 : vector<8x1xf32>
    %21 = arith.mulf %13, %20 : vector<8x1xf32>
    %22 = arith.addf %19, %21 : vector<8x1xf32>
    %23 = arith.mulf %12, %22 : vector<8x1xf32>
    %24 = arith.mulf %10, %9 : vector<8x32xf32>
    %cst_11 = arith.constant dense<0.000000e+00> : vector<8xf32>
    %25 = vector.multi_reduction <add>, %24, %cst_11 [1] : vector<8x32xf32> to vector<8xf32>
    %26 = vector.shape_cast %25 : vector<8xf32> to vector<8x1xf32>
    %27 = arith.addf %23, %26 : vector<8x1xf32>
    %c0_12 = arith.constant 0 : index
    %c0_13 = arith.constant 0 : index
    %28 = vector.load %arg6[%c0_12, %c0_13] : memref<8x1xf32, #tpu.memory_space<vmem>>, vector<8x1xf32>
    tpu.vector_store %arg6[%c0_12, %c0_13], %27 {strides = array<i32>} : memref<8x1xf32, #tpu.memory_space<vmem>>, vector<8x1xf32>,
    %c0_14 = arith.constant 0 : index
    %c0_15 = arith.constant 0 : index
    %29 = vector.load %arg4[%c0_14, %c0_15] : memref<8x1xf32, #tpu.memory_space<vmem>>, vector<8x1xf32>
    tpu.vector_store %arg4[%c0_14, %c0_15], %7 {strides = array<i32>} : memref<8x1xf32, #tpu.memory_space<vmem>>, vector<8x1xf32>,
    %c0_i32_16 = arith.constant 0 : i32
    %30 = arith.cmpi eq, %arg1, %c0_i32_16 : i32
    %31 = arith.extui %30 : i1 to i32
    %c0_i32_17 = arith.constant 0 : i32
    %32 = arith.cmpi ne, %31, %c0_i32_17 : i32
    scf.if %32 {
      %c0_18 = arith.constant 0 : index
      %c0_19 = arith.constant 0 : index
      %33 = vector.load %arg5[%c0_18, %c0_19] : memref<8x1xf32, #tpu.memory_space<vmem>>, vector<8x1xf32>
      %c0_20 = arith.constant 0 : index
      %c0_21 = arith.constant 0 : index
      %34 = vector.load %arg6[%c0_20, %c0_21] : memref<8x1xf32, #tpu.memory_space<vmem>>, vector<8x1xf32>
      %35 = arith.divf %34, %33 : vector<8x1xf32>
      %36 = math.log %33 : vector<8x1xf32>
      %37 = arith.subf %35, %36 : vector<8x1xf32>
      %c0_22 = arith.constant 0 : index
      %c0_23 = arith.constant 0 : index
      %38 = vector.load %arg3[%c0_22, %c0_23] : memref<8x1xf32, #tpu.memory_space<vmem>>, vector<8x1xf32>
      tpu.vector_store %arg3[%c0_22, %c0_23], %37 {strides = array<i32>} : memref<8x1xf32, #tpu.memory_space<vmem>>, vector<8x1xf32>,
    } else {
    }
    return
  }
  func.func @transform_0(%arg0: i32, %arg1: i32) -> (i32, i32) {
    %c0_i32 = arith.constant 0 : i32
    return %arg0, %arg1 : i32, i32
  }
  func.func @transform_1(%arg0: i32, %arg1: i32) -> (i32, i32) {
    %c0_i32 = arith.constant 0 : i32
    %c0_i32_0 = arith.constant 0 : i32
    return %arg0, %c0_i32 : i32, i32
  }
}

</mosaic_0001>

<llo_original>
// kernel: tpu_custom_call.1
$region0: #{tpu_custom_call.1}
  #allocation0 [shape = 'u32[]', space=smem, size = 0x4, offset = 0x4, fixed_abs, tag = 'smem constant byte address 0x4 - core index']
  #allocation1 [shape = 'u32[144,128]{1,0:T(1,128)}', space=vmem, size = 0x12000, scoped, tag = 'internal scratch']
  #allocation2 [shape = 'f32[8,1]{1,0:T(8,128)}', space=vmem, size = 0x1000, scoped, tag = 'scratch operand']
  #allocation3 [shape = 'f32[8,1]{1,0:T(8,128)}', space=vmem, size = 0x1000, scoped, tag = 'scratch operand']
  #allocation4 [shape = 'f32[8,1]{1,0:T(8,128)}', space=vmem, size = 0x1000, scoped, tag = 'scratch operand']
  %s0 = inlined_call_operand.hbm [shape: f32[8,32], index: 0, kind: input, shape index: {}]
  %s1 = inlined_call_operand.vmem [shape: f32[8,1], index: 1, kind: output, shape index: {}]
  %s2 = sld [smem:[#allocation0]]
  $region26: #{tpu_custom_call.1} parent=0
    _
  %s4 = ssub.s32 1, %s2
  %s5 = scalar_select 0, %s4, %s2
  $region1: #{tpu_custom_call.1} parent=0
    #allocation5 [shape = 'u8[4096]{0}', space=vmem, size = 0x1000, scoped, tag = 'input window, operand 0, single buffered']
    #allocation6 [shape = 's32[1]{0}', space=sflag, size = 0x4, scoped, tag = 'scoped memory for tpu_custom_call.1']
    %6 = vsyncpa [#allocation6], 0
    // Predicated region
    $region2: #{tpu_custom_call.1} parent=1 // pred_check
      _
    $region3: #{tpu_custom_call.1} parent=1 // pred_check_branch
      %8 = sbr.rel (0) target = $region5
    $region4: #{tpu_custom_call.1} parent=1 // pred_region
      %s10 = ssub.s32 128, 128
      %11 = vsyncadd [#allocation6], %s10
      %s13 = sshll.u32 [#allocation5], 4
      %s14 = int_to_ptr.vmem [resolvable:$true] %s13
      %16 = dma.hbm_to_vmem [thread:$0]  %s0, 128, %s14, [#allocation6]
    $region5: #{tpu_custom_call.1} parent=1 // pred_fallthru
      _
    // Predicated region
    $region6: #{tpu_custom_call.1} parent=1 // pred_check
      _
    $region7: #{tpu_custom_call.1} parent=1 // pred_check_branch
      %18 = sbr.rel (0) target = $region9
    $region8: #{tpu_custom_call.1} parent=1 // pred_region
      %19 = dma.done [#allocation6], 128
    $region9: #{tpu_custom_call.1} parent=1 // pred_fallthru
      _
    %p20 = scmp.eq.s32.totalorder 0, 0
    // Predicated region
    $region10: #{tpu_custom_call.1} parent=1 // pred_check
      %p21 = pneg %p20
    $region11: #{tpu_custom_call.1} parent=1 // pred_check_branch
      %23 = sbr.rel (%p21) target = $region13
    $region12: #{tpu_custom_call.1} parent=1 // pred_region
      %vm24 = vcmask 7168
      %25 = vst.msk [vmem:[#allocation2] sm:$0xff] %vm24, -1e+30
      %26 = vst.msk [vmem:[#allocation3] sm:$0xff] %vm24, 0.0
      %27 = vst.msk [vmem:[#allocation4] sm:$0xff] %vm24, 0.0
    $region13: #{tpu_custom_call.1} parent=1 // pred_fallthru
      _
    %v28 = vld [vmem:[#allocation5] sm:$0xff]
    %v29 = vld [vmem:[#allocation2] sm:$0xff]
    %vm30 = vcmask 261120
    %v31 = vsel %vm30, %v28, -inf
    %32 = vmax.xlane.f32.xlu0 %v31
    %v33 = vpop.xlane.xlu0 %32
    %v34 = vmax.f32 %v29, %v33
    %36 = vset.pattern.permute.xlu0 0
    %37 = vperm.xlu0 %36, %v34
    %v38 = vpop.permute.xlu0 %37
    %v40 = vsub.f32 %v28, %v38
    %v41 = vmul.f32 %v40, 1.442695
    %v42 = vpow.pop %v41
    %v43 = vsub.f32 %v29, %v34
    %v44 = vmul.f32 %v43, 1.442695
    %v45 = vpow.pop %v44
    %v46 = vld [vmem:[#allocation3] sm:$0xff]
    %v47 = vmul.f32 %v45, %v46
    %v48 = vsel %vm30, %v42, 0.0
    %49 = vadd.xlane.f32.xlu0 %v48
    %v50 = vpop.xlane.xlu0 %49
    %v51 = vadd.f32 %v47, %v50
    %vm52 = vcmask 7168
    %53 = vst.msk [vmem:[#allocation3] sm:$0xff] %vm52, %v51
    %v54 = vld [vmem:[#allocation4] sm:$0xff]
    %v55 = vmul.f32 %v46, %v43
    %v56 = vadd.f32 %v54, %v55
    %v57 = vmul.f32 %v45, %v56
    %v58 = vmul.f32 %v42, %v40
    %v59 = vsel %vm30, %v58, 0.0
    %60 = vadd.xlane.f32.xlu0 %v59
    %v61 = vpop.xlane.xlu0 %60
    %v62 = vadd.f32 %v57, %v61
    %63 = vst.msk [vmem:[#allocation4] sm:$0xff] %vm52, %v62
    %64 = vst.msk [vmem:[#allocation2] sm:$0xff] %vm52, %v34
    // Predicated region
    $region14: #{tpu_custom_call.1} parent=1 // pred_check
      %p65 = pneg %p20
    $region15: #{tpu_custom_call.1} parent=1 // pred_check_branch
      %67 = sbr.rel (%p65) target = $region17
    $region16: #{tpu_custom_call.1} parent=1 // pred_region
      %v68 = vld [vmem:[#allocation3] sm:$0xff]
      %v69 = vld [vmem:[#allocation4] sm:$0xff]
      %v70 = vrcp.pop %v68
      %v71 = vmul.f32 %v69, %v70
      %v72 = vlog2.pop %v68
      %v73 = vmul.f32 %v72, 0.6931472
      %v74 = vsub.f32 %v71, %v73
      %75 = vst.msk [vmem:[%s1] sm:$0xff] %vm52, %v74
    $region17: #{tpu_custom_call.1} parent=1 // pred_fallthru
      _
    // Predicated region
    $region18: #{tpu_custom_call.1} parent=1 // pred_check
      _
    $region19: #{tpu_custom_call.1} parent=1 // pred_check_branch
      %77 = sbr.rel (0) target = $region21
    $region20: #{tpu_custom_call.1} parent=1 // pred_region
      _
    $region21: #{tpu_custom_call.1} parent=1 // pred_fallthru
      _
    // Predicated region
    $region22: #{tpu_custom_call.1} parent=1 // pred_check
      _
    $region23: #{tpu_custom_call.1} parent=1 // pred_check_branch
      %79 = sbr.rel (0) target = $region25
    $region24: #{tpu_custom_call.1} parent=1 // pred_region
      _
    $region25: #{tpu_custom_call.1} parent=1 // pred_fallthru
      _
    %80 = vsyncpa [#allocation6], 1

</llo_original>
